<compile_context>
chip_gen: v7x
topology: tpu7x:2x2x1
jax: 0.10.0
libtpu: 0.0.40
codegen_flags: <defaults>
</compile_context>

<pallas_src>
import jax
import jax.numpy as jnp
from jax.experimental import pallas as pl
from jax.experimental.pallas import tpu as pltpu

LN_EPS = 1e-5  # nn.LayerNorm default


def _ln_logits_kernel(x_ref, g_ref, b_ref, w_ref, wb_ref, o_ref, y_ref):
    """Fused LayerNorm (hoisted to j==0) + bf16 output projection on the MXU."""
    j = pl.program_id(1)

    @pl.when(j == 0)
    def _():
        x = x_ref[...].astype(jnp.float32)                      # (tm, D) f32 stats
        mean = jnp.mean(x, axis=-1, keepdims=True)
        xc = x - mean
        var = jnp.mean(xc * xc, axis=-1, keepdims=True)
        xn = xc * jax.lax.rsqrt(var + LN_EPS)
        y = xn * g_ref[...] + b_ref[...]                        # gamma/beta are f32
        y_ref[...] = y.astype(y_ref.dtype)                      # bf16 scratch

    logits = jnp.dot(y_ref[...], w_ref[...],                    # bf16 x bf16 -> f32
                     preferred_element_type=jnp.float32)        # (tm, tv)
    o_ref[...] = (logits + wb_ref[...]).astype(o_ref.dtype)


def _pick_tile(n, target, align):
    """Largest multiple of `align` that divides n and is <= target, else full n."""
    t = min(target, n)
    t -= t % align
    while t >= align:
        if n % t == 0:
            return t
        t -= align
    return n  # full extent is always a legal block dim


def layernorm_logits(x, gamma, beta, w_t, w_b, *, tm_target=256, tv_target=1024):
    """x: [R, dim] (bf16) -> logits [R, V] f32, with w_t: [dim, V] (bf16), w_b: [V]."""
    R, D = x.shape
    V = w_t.shape[1]
    tm = _pick_tile(R, tm_target, 8)
    tv = _pick_tile(V, tv_target, 128)

    gamma2 = gamma.reshape(1, D).astype(jnp.float32)
    beta2 = beta.reshape(1, D).astype(jnp.float32)
    wb2 = w_b.reshape(1, V).astype(jnp.float32)

    xb = x.dtype.itemsize
    wb = w_t.dtype.itemsize
    # double-buffered inputs/output + LN scratch
    vmem_need = 2 * (tm * D * xb + D * tv * wb + tm * tv * 4) + tm * D * 2
    vmem_limit = int(min(max(vmem_need * 2, 32 * 1024 * 1024), 48 * 1024 * 1024))

    cost = pl.CostEstimate(
        flops=2 * R * D * V + 8 * R * D,
        transcendentals=R,
        bytes_accessed=R * D * xb + D * V * wb + R * V * 4)

    return pl.pallas_call(
        _ln_logits_kernel,
        out_shape=jax.ShapeDtypeStruct((R, V), jnp.float32),
        grid_spec=pltpu.PrefetchScalarGridSpec(
            num_scalar_prefetch=0,
            grid=(R // tm, V // tv),                              # vocab axis inner
            in_specs=[
                pl.BlockSpec((tm, D), lambda i, j: (i, 0)),       # activations (bf16)
                pl.BlockSpec((1, D), lambda i, j: (0, 0)),        # ln gamma (f32)
                pl.BlockSpec((1, D), lambda i, j: (0, 0)),        # ln beta  (f32)
                pl.BlockSpec((D, tv), lambda i, j: (0, j)),       # W^T tile (bf16)
                pl.BlockSpec((1, tv), lambda i, j: (0, j)),       # bias tile (f32)
            ],
            out_specs=pl.BlockSpec((tm, tv), lambda i, j: (i, j)),
            scratch_shapes=[pltpu.VMEM((tm, D), jnp.bfloat16)],   # LN result, reused over j
        ),
        compiler_params=pltpu.CompilerParams(
            dimension_semantics=("parallel", "arbitrary"),        # j carries the LN scratch
            vmem_limit_bytes=vmem_limit),
        cost_estimate=cost,
    )(x, gamma2, beta2, w_t, wb2)


class TransformerWrapperPallas:
    """JAX/Pallas port of memformer TransformerWrapper."""

    def __init__(self, *, num_tokens, max_seq_len, dim, heads=8,
                 return_logits=True, key=None):
        del heads
        if key is None:
            key = jax.random.PRNGKey(0)
        k_emb, k_w, k_b = jax.random.split(key, 3)
        # deterministic synthetic params (shapes from the torch module __init__);
        # embedding + projection weights stored in bf16 for the MXU / HBM traffic.
        self.token_emb = (jax.random.normal(k_emb, (num_tokens, dim), jnp.float32)
                          * 0.02).astype(jnp.bfloat16)
        self.ln_gamma = jnp.ones((dim,), jnp.float32)
        self.ln_beta = jnp.zeros((dim,), jnp.float32)
        bound = 1.0 / (dim ** 0.5)
        # nn.Linear(dim, num_tokens): weight [num_tokens, dim]; store transposed bf16.
        self.w_t = jax.random.uniform(k_w, (dim, num_tokens), jnp.float32,
                                      -bound, bound).astype(jnp.bfloat16)
        self.w_b = jax.random.uniform(k_b, (num_tokens,), jnp.float32,
                                      -bound, bound)
        self.max_seq_len = max_seq_len
        self.num_tokens = num_tokens
        self.dim = dim
        self.return_logits = return_logits

    def __call__(self, x):
        # x: [B, N] int32 token ids
        B, N = x.shape
        # TODO(synk): `layer_blocks` is an externally injected sub-module in the
        # torch code; treated as identity here.
        # TODO(synk): the embedding gather could be fused into the kernel via
        # scalar-prefetched token ids; kept as plain-JAX glue with a bf16 table
        # so the activation round trip through HBM is halved.
        h = jnp.take(self.token_emb, x.reshape(-1), axis=0)      # [B*N, dim] bf16
        if not self.return_logits:
            hf = h.astype(jnp.float32)
            mean = jnp.mean(hf, axis=-1, keepdims=True)
            var = jnp.mean((hf - mean) ** 2, axis=-1, keepdims=True)
            hn = (hf - mean) * jax.lax.rsqrt(var + LN_EPS)
            return (hn * self.ln_gamma + self.ln_beta).reshape(B, N, self.dim)
        logits = layernorm_logits(h, self.ln_gamma, self.ln_beta,
                                  self.w_t, self.w_b)
        return logits.reshape(B, N, self.num_tokens)


def _reference(model, x):
    """Pure-JAX reference mirroring the kernel's bf16 matmul numerics."""
    h = jnp.take(model.token_emb, x.reshape(-1), axis=0).astype(jnp.float32)
    mean = jnp.mean(h, axis=-1, keepdims=True)
    var = jnp.mean((h - mean) ** 2, axis=-1, keepdims=True)
    hn = (h - mean) * jax.lax.rsqrt(var + LN_EPS)
    hn = hn * model.ln_gamma + model.ln_beta
    yb = hn.astype(jnp.bfloat16).astype(jnp.float32)
    w = model.w_t.astype(jnp.float32)
    out = yb @ w + model.w_b
    return out.reshape(x.shape[0], x.shape[1], model.num_tokens)


if __name__ == "__main__":
    key = jax.random.PRNGKey(0)
    num_tokens, max_seq_len, dim = 256, 64, 128
    B, N = 2, 16

    model = TransformerWrapperPallas(num_tokens=num_tokens,
                                     max_seq_len=max_seq_len,
                                     dim=dim, key=key)

    ids = jax.random.randint(jax.random.PRNGKey(1), (B, N), 0, num_tokens,
                             dtype=jnp.int32)

    logits = model(ids)
    logits = jax.block_until_ready(logits)

    ref = _reference(model, ids)
    assert logits.shape == (B, N, num_tokens)
    assert jnp.allclose(logits, ref, atol=1e-2, rtol=1e-2), "mismatch vs reference"

    print("KERNEL_OK")
</pallas_src>

<mosaic_0001>
module attributes {stable_mosaic.version = 11 : i64} {
  func.func @_ln_logits_kernel(%arg0: i32, %arg1: i32, %arg2: memref<32x128xbf16, #tpu.memory_space<vmem>>, %arg3: memref<1x128xf32, #tpu.memory_space<vmem>>, %arg4: memref<1x128xf32, #tpu.memory_space<vmem>>, %arg5: memref<128x256xbf16, #tpu.memory_space<vmem>>, %arg6: memref<1x256xf32, #tpu.memory_space<vmem>>, %arg7: memref<32x256xf32, #tpu.memory_space<vmem>>, %arg8: memref<32x128xbf16, #tpu.memory_space<vmem>>) attributes {dimension_semantics = [#tpu.dimension_semantics<parallel>, #tpu.dimension_semantics<arbitrary>], iteration_bounds = array<i64: 1, 1>, scalar_prefetch = 0 : i64, scratch_operands = 1 : i64, tpu.core_type = #tpu.core_type<tc>, window_params = [{transform_indices = @transform_0, window_bounds = array<i64: 32, 128>}, {pipeline_mode = #tpu.pipeline_mode<synchronous>, transform_indices = @transform_1, window_bounds = array<i64: 1, 128>}, {pipeline_mode = #tpu.pipeline_mode<synchronous>, transform_indices = @transform_2, window_bounds = array<i64: 1, 128>}, {transform_indices = @transform_3, window_bounds = array<i64: 128, 256>}, {transform_indices = @transform_4, window_bounds = array<i64: 1, 256>}, {transform_indices = @transform_5, window_bounds = array<i64: 32, 256>}]} {
    %c0_i32 = arith.constant 0 : i32
    %0 = arith.cmpi eq, %arg1, %c0_i32 : i32
    %1 = arith.extui %0 : i1 to i32
    %c0_i32_0 = arith.constant 0 : i32
    %2 = arith.cmpi ne, %1, %c0_i32_0 : i32
    scf.if %2 {
      %c0_8 = arith.constant 0 : index
      %c0_9 = arith.constant 0 : index
      %10 = vector.load %arg2[%c0_8, %c0_9] : memref<32x128xbf16, #tpu.memory_space<vmem>>, vector<32x128xbf16>
      %11 = arith.extf %10 : vector<32x128xbf16> to vector<32x128xf32>
      %cst_10 = arith.constant dense<0.000000e+00> : vector<32xf32>
      %12 = vector.multi_reduction <add>, %11, %cst_10 [1] : vector<32x128xf32> to vector<32xf32>
      %13 = vector.shape_cast %12 : vector<32xf32> to vector<32x1xf32>
      %cst_11 = arith.constant 1.280000e+02 : f32
      %14 = vector.broadcast %cst_11 : f32 to vector<32x1xf32>
      %15 = arith.divf %13, %14 : vector<32x1xf32>
      %16 = vector.broadcast %15 : vector<32x1xf32> to vector<32x128xf32>
      %17 = arith.subf %11, %16 : vector<32x128xf32>
      %18 = arith.mulf %17, %17 : vector<32x128xf32>
      %cst_12 = arith.constant dense<0.000000e+00> : vector<32xf32>
      %19 = vector.multi_reduction <add>, %18, %cst_12 [1] : vector<32x128xf32> to vector<32xf32>
      %20 = vector.shape_cast %19 : vector<32xf32> to vector<32x1xf32>
      %cst_13 = arith.constant 1.280000e+02 : f32
      %21 = vector.broadcast %cst_13 : f32 to vector<32x1xf32>
      %22 = arith.divf %20, %21 : vector<32x1xf32>
      %cst_14 = arith.constant 9.99999974E-6 : f32
      %23 = vector.broadcast %cst_14 : f32 to vector<32x1xf32>
      %24 = arith.addf %22, %23 : vector<32x1xf32>
      %25 = math.rsqrt %24 : vector<32x1xf32>
      %26 = vector.broadcast %25 : vector<32x1xf32> to vector<32x128xf32>
      %27 = arith.mulf %17, %26 : vector<32x128xf32>
      %c0_15 = arith.constant 0 : index
      %c0_16 = arith.constant 0 : index
      %28 = vector.load %arg3[%c0_15, %c0_16] : memref<1x128xf32, #tpu.memory_space<vmem>>, vector<1x128xf32>
      %29 = vector.broadcast %28 : vector<1x128xf32> to vector<32x128xf32>
      %30 = arith.mulf %27, %29 : vector<32x128xf32>
      %c0_17 = arith.constant 0 : index
      %c0_18 = arith.constant 0 : index
      %31 = vector.load %arg4[%c0_17, %c0_18] : memref<1x128xf32, #tpu.memory_space<vmem>>, vector<1x128xf32>
      %32 = vector.broadcast %31 : vector<1x128xf32> to vector<32x128xf32>
      %33 = arith.addf %30, %32 : vector<32x128xf32>
      %34 = arith.truncf %33 : vector<32x128xf32> to vector<32x128xbf16>
      %c0_19 = arith.constant 0 : index
      %c0_20 = arith.constant 0 : index
      %35 = vector.load %arg8[%c0_19, %c0_20] : memref<32x128xbf16, #tpu.memory_space<vmem>>, vector<32x128xbf16>
      tpu.vector_store %arg8[%c0_19, %c0_20], %34 {strides = array<i32>} : memref<32x128xbf16, #tpu.memory_space<vmem>>, vector<32x128xbf16>,
    } else {
    }
    %c0 = arith.constant 0 : index
    %c0_1 = arith.constant 0 : index
    %3 = vector.load %arg8[%c0, %c0_1] : memref<32x128xbf16, #tpu.memory_space<vmem>>, vector<32x128xbf16>
    %c0_2 = arith.constant 0 : index
    %c0_3 = arith.constant 0 : index
    %4 = vector.load %arg5[%c0_2, %c0_3] : memref<128x256xbf16, #tpu.memory_space<vmem>>, vector<128x256xbf16>
    %cst = arith.constant dense<0.000000e+00> : vector<32x256xf32>
    %5 = tpu.matmul %3, %4, %cst {dimension_numbers = #tpu.dot_dimension_numbers<[1], [0], [0], [1], [0, 0, 1, 1], [], []>} : vector<32x128xbf16>, vector<128x256xbf16>, vector<32x256xf32> -> vector<32x256xf32>
    %c0_4 = arith.constant 0 : index
    %c0_5 = arith.constant 0 : index
    %6 = vector.load %arg6[%c0_4, %c0_5] : memref<1x256xf32, #tpu.memory_space<vmem>>, vector<1x256xf32>
    %7 = vector.broadcast %6 : vector<1x256xf32> to vector<32x256xf32>
    %8 = arith.addf %5, %7 : vector<32x256xf32>
    %c0_6 = arith.constant 0 : index
    %c0_7 = arith.constant 0 : index
    %9 = vector.load %arg7[%c0_6, %c0_7] : memref<32x256xf32, #tpu.memory_space<vmem>>, vector<32x256xf32>
    tpu.vector_store %arg7[%c0_6, %c0_7], %8 {strides = array<i32>} : memref<32x256xf32, #tpu.memory_space<vmem>>, vector<32x256xf32>,
    return
  }
  func.func @transform_0(%arg0: i32, %arg1: i32) -> (i32, i32) {
    %c0_i32 = arith.constant 0 : i32
    %c0_i32_0 = arith.constant 0 : i32
    return %arg0, %c0_i32 : i32, i32
  }
  func.func @transform_1(%arg0: i32, %arg1: i32) -> (i32, i32) {
    %c0_i32 = arith.constant 0 : i32
    %c0_i32_0 = arith.constant 0 : i32
    %c0_i32_1 = arith.constant 0 : i32
    return %c0_i32, %c0_i32_0 : i32, i32
  }
  func.func @transform_2(%arg0: i32, %arg1: i32) -> (i32, i32) {
    %c0_i32 = arith.constant 0 : i32
    %c0_i32_0 = arith.constant 0 : i32
    %c0_i32_1 = arith.constant 0 : i32
    return %c0_i32, %c0_i32_0 : i32, i32
  }
  func.func @transform_3(%arg0: i32, %arg1: i32) -> (i32, i32) {
    %c0_i32 = arith.constant 0 : i32
    %c0_i32_0 = arith.constant 0 : i32
    return %c0_i32, %arg1 : i32, i32
  }
  func.func @transform_4(%arg0: i32, %arg1: i32) -> (i32, i32) {
    %c0_i32 = arith.constant 0 : i32
    %c0_i32_0 = arith.constant 0 : i32
    return %c0_i32, %arg1 : i32, i32
  }
  func.func @transform_5(%arg0: i32, %arg1: i32) -> (i32, i32) {
    %c0_i32 = arith.constant 0 : i32
    return %arg0, %arg1 : i32, i32
  }
}

</mosaic_0001>

<llo_original>
// kernel: tpu_custom_call.1
$region0: #{tpu_custom_call.1}
  #allocation0 [shape = 'u32[]', space=smem, size = 0x4, offset = 0x4, fixed_abs, tag = 'smem constant byte address 0x4 - core index']
  #allocation1 [shape = 'u32[144,128]{1,0:T(1,128)}', space=vmem, size = 0x12000, scoped, tag = 'internal scratch']
  #allocation2 [shape = 'bf16[32,128]{1,0:T(16,128)(2,1)}', space=vmem, size = 0x2000, scoped, tag = 'scratch operand']
  %s0 = inlined_call_operand.hbm [shape: bf16[32,128], index: 0, kind: input, shape index: {}]
  %s1 = inlined_call_operand.vmem [shape: f32[1,128], index: 1, kind: input, shape index: {}]
  %s2 = inlined_call_operand.vmem [shape: f32[1,128], index: 2, kind: input, shape index: {}]
  %s3 = inlined_call_operand.hbm [shape: bf16[128,256], index: 3, kind: input, shape index: {}]
  %s4 = inlined_call_operand.vmem [shape: f32[1,256], index: 4, kind: input, shape index: {}]
  %s5 = inlined_call_operand.hbm [shape: f32[32,256], index: 5, kind: output, shape index: {}]
  %s6 = sld [smem:[#allocation0]]
  $region42: #{tpu_custom_call.1} parent=0
    _
  %s8 = ssub.s32 1, %s6
  %s9 = scalar_select 0, %s8, %s6
  $region1: #{tpu_custom_call.1} parent=0
    #allocation3 [shape = 'u8[8192]{0}', space=vmem, size = 0x2000, scoped, tag = 'input window, operand 0, single buffered']
    #allocation4 [shape = 's32[1]{0}', space=sflag, size = 0x4, scoped, tag = 'scoped memory for tpu_custom_call.1']
    #allocation5 [shape = 's32[1]{0}', space=sflag, size = 0x4, scoped, tag = 'scoped memory for tpu_custom_call.1']
    #allocation6 [shape = 'u8[65536]{0}', space=vmem, size = 0x10000, scoped, tag = 'input window, operand 3, single buffered']
    #allocation7 [shape = 's32[1]{0}', space=sflag, size = 0x4, scoped, tag = 'scoped memory for tpu_custom_call.1']
    #allocation8 [shape = 'u8[32768]{0}', space=vmem, size = 0x8000, scoped, tag = 'output window, operand 0, single buffered']
    %10 = vsyncpa [#allocation4], 0
    %11 = vsyncpa [#allocation7], 0
    %12 = vsyncpa [#allocation5], 0
    // Predicated region
    $region2: #{tpu_custom_call.1} parent=1 // pred_check
      _
    $region3: #{tpu_custom_call.1} parent=1 // pred_check_branch
      %14 = sbr.rel (0) target = $region5
    $region4: #{tpu_custom_call.1} parent=1 // pred_region
      %s16 = ssub.s32 256, 256
      %17 = vsyncadd [#allocation4], %s16
      %s18 = sshll.u32 [#allocation3], 4
      %s19 = int_to_ptr.vmem [resolvable:$true] %s18
      %24 = dma.hbm_to_vmem [thread:$0]  %s0, 256, %s19, [#allocation4], 64, 64, 4
    $region5: #{tpu_custom_call.1} parent=1 // pred_fallthru
      _
    // Predicated region
    $region6: #{tpu_custom_call.1} parent=1 // pred_check
      _
    $region7: #{tpu_custom_call.1} parent=1 // pred_check_branch
      %26 = sbr.rel (0) target = $region9
    $region8: #{tpu_custom_call.1} parent=1 // pred_region
      _
    $region9: #{tpu_custom_call.1} parent=1 // pred_fallthru
      _
    // Predicated region
    $region10: #{tpu_custom_call.1} parent=1 // pred_check
      _
    $region11: #{tpu_custom_call.1} parent=1 // pred_check_branch
      %28 = sbr.rel (0) target = $region13
    $region12: #{tpu_custom_call.1} parent=1 // pred_region
      _
    $region13: #{tpu_custom_call.1} parent=1 // pred_fallthru
      _
    // Predicated region
    $region14: #{tpu_custom_call.1} parent=1 // pred_check
      _
    $region15: #{tpu_custom_call.1} parent=1 // pred_check_branch
      %30 = sbr.rel (0) target = $region17
    $region16: #{tpu_custom_call.1} parent=1 // pred_region
      %s32 = ssub.s32 2048, 2048
      %33 = vsyncadd [#allocation7], %s32
      %s34 = sshll.u32 [#allocation6], 4
      %s35 = int_to_ptr.vmem [resolvable:$true] %s34
      %40 = dma.hbm_to_vmem [thread:$0]  %s3, 2048, %s35, [#allocation7], 128, 128, 8
    $region17: #{tpu_custom_call.1} parent=1 // pred_fallthru
      _
    // Predicated region
    $region18: #{tpu_custom_call.1} parent=1 // pred_check
      _
    $region19: #{tpu_custom_call.1} parent=1 // pred_check_branch
      %42 = sbr.rel (0) target = $region21
    $region20: #{tpu_custom_call.1} parent=1 // pred_region
      _
    $region21: #{tpu_custom_call.1} parent=1 // pred_fallthru
      _
    // Predicated region
    $region22: #{tpu_custom_call.1} parent=1 // pred_check
      _
    $region23: #{tpu_custom_call.1} parent=1 // pred_check_branch
      %44 = sbr.rel (0) target = $region25
    $region24: #{tpu_custom_call.1} parent=1 // pred_region
      %45 = dma.done [#allocation4], 256
    $region25: #{tpu_custom_call.1} parent=1 // pred_fallthru
      _
    // Predicated region
    $region26: #{tpu_custom_call.1} parent=1 // pred_check
      _
    $region27: #{tpu_custom_call.1} parent=1 // pred_check_branch
      %47 = sbr.rel (0) target = $region29
    $region28: #{tpu_custom_call.1} parent=1 // pred_region
      %48 = dma.done [#allocation7], 2048
    $region29: #{tpu_custom_call.1} parent=1 // pred_fallthru
      _
    %p50 = scmp.eq.s32.totalorder 0, 0
    // Predicated region
    $region30: #{tpu_custom_call.1} parent=1 // pred_check
      %p51 = pneg %p50
    $region31: #{tpu_custom_call.1} parent=1 // pred_check_branch
      %53 = sbr.rel (%p51) target = $region33
    $region32: #{tpu_custom_call.1} parent=1 // pred_region
      %v54 = vld [vmem:[#allocation3] sm:$0xf]
      %v55 = vld [vmem:[#allocation3 + $0x4] sm:$0xf]
      %v56 = vld [vmem:[#allocation3 + $0x8] sm:$0xf]
      %v57 = vld [vmem:[#allocation3 + $0xc] sm:$0xf]
      %v58 = vunpack.c.l.bf16 %v54
      %v59 = vunpack.c.l.bf16 %v55
      %v60 = vunpack.c.l.bf16 %v56
      %v61 = vunpack.c.l.bf16 %v57
      %62 = vadd.xlane.f32.xlu0 %v58
      %v63 = vpop.xlane.xlu0 %62
      %64 = vadd.xlane.f32.xlu0 %v59
      %v65 = vpop.xlane.xlu0 %64
      %66 = vadd.xlane.f32.xlu0 %v60
      %v67 = vpop.xlane.xlu0 %66
      %68 = vadd.xlane.f32.xlu0 %v61
      %v69 = vpop.xlane.xlu0 %68
      %v70 = vrcp.pop 128.0
      %v71 = vmul.f32 %v63, %v70
      %v72 = vmul.f32 %v65, %v70
      %v73 = vmul.f32 %v67, %v70
      %v74 = vmul.f32 %v69, %v70
      %v75 = vsub.f32 %v58, %v71
      %v76 = vsub.f32 %v59, %v72
      %v77 = vsub.f32 %v60, %v73
      %v78 = vsub.f32 %v61, %v74
      %v79 = vmul.f32 %v75, %v75
      %v80 = vmul.f32 %v76, %v76
      %v81 = vmul.f32 %v77, %v77
      %v82 = vmul.f32 %v78, %v78
      %83 = vadd.xlane.f32.xlu0 %v79
      %v84 = vpop.xlane.xlu0 %83
      %85 = vadd.xlane.f32.xlu0 %v80
      %v86 = vpop.xlane.xlu0 %85
      %87 = vadd.xlane.f32.xlu0 %v81
      %v88 = vpop.xlane.xlu0 %87
      %89 = vadd.xlane.f32.xlu0 %v82
      %v90 = vpop.xlane.xlu0 %89
      %v91 = vmul.f32 %v84, %v70
      %v92 = vmul.f32 %v86, %v70
      %v93 = vmul.f32 %v88, %v70
      %v94 = vmul.f32 %v90, %v70
      %v95 = vadd.f32 %v91, 1e-05
      %v96 = vadd.f32 %v92, 1e-05
      %v97 = vadd.f32 %v93, 1e-05
      %v98 = vadd.f32 %v94, 1e-05
      %v99 = vrsqrt.pop %v95
      %v100 = vrsqrt.pop %v96
      %v101 = vrsqrt.pop %v97
      %v102 = vrsqrt.pop %v98
      %v103 = vmul.f32 %v75, %v99
      %v104 = vmul.f32 %v76, %v100
      %v105 = vmul.f32 %v77, %v101
      %v106 = vmul.f32 %v78, %v102
      %v107 = vld [vmem:[%s1] sm:$0x1]
      %v109 = vlaneseq
      %v110 = vshrl.u32 %v109, 7
      %v111 = vsub.s32 0, %v110
      %v112 = vrot.slane %v107, %v111
      %v114 = vmul.f32 %v103, %v112
      %v115 = vmul.f32 %v104, %v112
      %v116 = vmul.f32 %v105, %v112
      %v117 = vmul.f32 %v106, %v112
      %v118 = vld [vmem:[%s2] sm:$0x1]
      %v120 = vlaneseq
      %v121 = vshrl.u32 %v120, 7
      %v122 = vsub.s32 0, %v121
      %v123 = vrot.slane %v118, %v122
      %v125 = vadd.f32 %v114, %v123
      %v126 = vadd.f32 %v115, %v123
      %v127 = vadd.f32 %v116, %v123
      %v128 = vadd.f32 %v117, %v123
      %v129 = vpack.c.bf16 %v126, %v125
      %v130 = vpack.c.bf16 %v128, %v127
      %131 = vst [vmem:[#allocation2] sm:$0xff] %v129
      %132 = vst [vmem:[#allocation2 + $0x8] sm:$0xff] %v130
    $region33: #{tpu_custom_call.1} parent=1 // pred_fallthru
      _
    %v133 = vld [vmem:[#allocation2] sm:$0xff]
    %v134 = vld [vmem:[#allocation2 + $0x8] sm:$0xff]
    %v135 = vld [vmem:[#allocation6] sm:$0xff]
    %v136 = vld [vmem:[#allocation6 + $0x8] sm:$0xff]
    %v137 = vld [vmem:[#allocation6 + $0x10] sm:$0xff]
    %v138 = vld [vmem:[#allocation6 + $0x18] sm:$0xff]
    %v139 = vld [vmem:[#allocation6 + $0x20] sm:$0xff]
    %v140 = vld [vmem:[#allocation6 + $0x28] sm:$0xff]
    %v141 = vld [vmem:[#allocation6 + $0x30] sm:$0xff]
    %v142 = vld [vmem:[#allocation6 + $0x38] sm:$0xff]
    %v143 = vld [vmem:[#allocation6 + $0x40] sm:$0xff]
    %v144 = vld [vmem:[#allocation6 + $0x48] sm:$0xff]
    %v145 = vld [vmem:[#allocation6 + $0x50] sm:$0xff]
    %v146 = vld [vmem:[#allocation6 + $0x58] sm:$0xff]
    %v147 = vld [vmem:[#allocation6 + $0x60] sm:$0xff]
    %v148 = vld [vmem:[#allocation6 + $0x68] sm:$0xff]
    %v149 = vld [vmem:[#allocation6 + $0x70] sm:$0xff]
    %v150 = vld [vmem:[#allocation6 + $0x78] sm:$0xff]
    %v151 = vld [vmem:[%s4] sm:$0x3]
    %v153 = vlaneseq
    %v154 = vshrl.u32 %v153, 7
    %v155 = vsub.s32 0, %v154
    %v156 = vrot.slane %v151, %v155
    %v157 = vlaneseq
    %v158 = vshrl.u32 %v157, 7
    %v159 = vsub.s32 1, %v158
    %v160 = vrot.slane %v151, %v159
    %v179 = vunpack.c.l.b16 %v135
    %v180 = vunpack.c.h.b16 %v135
    %v181 = vunpack.c.l.b16 %v136
    %v182 = vunpack.c.h.b16 %v136
    %v183 = vunpack.c.l.b16 %v137
    %v184 = vunpack.c.h.b16 %v137
    %v185 = vunpack.c.l.b16 %v138
    %v186 = vunpack.c.h.b16 %v138
    %v187 = vunpack.c.l.b16 %v139
    %v188 = vunpack.c.h.b16 %v139
    %v189 = vunpack.c.l.b16 %v140
    %v190 = vunpack.c.h.b16 %v140
    %v191 = vunpack.c.l.b16 %v141
    %v192 = vunpack.c.h.b16 %v141
    %v193 = vunpack.c.l.b16 %v142
    %v194 = vunpack.c.h.b16 %v142
    %v195 = vunpack.c.l.b16 %v143
    %v196 = vunpack.c.h.b16 %v143
    %v197 = vunpack.c.l.b16 %v144
    %v198 = vunpack.c.h.b16 %v144
    %v199 = vunpack.c.l.b16 %v145
    %v200 = vunpack.c.h.b16 %v145
    %v201 = vunpack.c.l.b16 %v146
    %v202 = vunpack.c.h.b16 %v146
    %v203 = vunpack.c.l.b16 %v147
    %v204 = vunpack.c.h.b16 %v147
    %v205 = vunpack.c.l.b16 %v148
    %v206 = vunpack.c.h.b16 %v148
    %v207 = vunpack.c.l.b16 %v149
    %v208 = vunpack.c.h.b16 %v149
    %v209 = vunpack.c.l.b16 %v150
    %v210 = vunpack.c.h.b16 %v150
    %v211 = vpack.c.b16 %v181, %v179
    %v212 = vpack.c.b16 %v182, %v180
    %v213 = vpack.c.b16 %v185, %v183
    %v214 = vpack.c.b16 %v186, %v184
    %v215 = vpack.c.b16 %v189, %v187
    %v216 = vpack.c.b16 %v190, %v188
    %v217 = vpack.c.b16 %v193, %v191
    %v218 = vpack.c.b16 %v194, %v192
    %v219 = vpack.c.b16 %v197, %v195
    %v220 = vpack.c.b16 %v198, %v196
    %v221 = vpack.c.b16 %v201, %v199
    %v222 = vpack.c.b16 %v202, %v200
    %v223 = vpack.c.b16 %v205, %v203
    %v224 = vpack.c.b16 %v206, %v204
    %v225 = vpack.c.b16 %v209, %v207
    %v226 = vpack.c.b16 %v210, %v208
    %243 = vmatprep.subr.bf16.mxu0 %v212
    %244 = vmatpush1.bf16.msra.mxu0 %v211
    %245 = vmatprep.subr.bf16.mxu0 %v214
    %246 = vmatpush1.bf16.msra.mxu0 %v213
    %247 = vmatprep.subr.bf16.mxu0 %v216
    %248 = vmatpush1.bf16.msra.mxu0 %v215
    %249 = vmatprep.subr.bf16.mxu0 %v218
    %250 = vmatpush1.bf16.msra.mxu0 %v217
    %251 = vmatprep.subr.bf16.mxu0 %v220
    %252 = vmatpush1.bf16.msra.mxu0 %v219
    %253 = vmatprep.subr.bf16.mxu0 %v222
    %254 = vmatpush1.bf16.msra.mxu0 %v221
    %255 = vmatprep.subr.bf16.mxu0 %v224
    %256 = vmatpush1.bf16.msra.mxu0 %v223
    %257 = vmatprep.subr.bf16.mxu0 %v226
    %258 = vmatpush1.bf16.msra.mxu0 %v225
    %259 = vmatprep.subr.bf16.mxu0 0
    %260 = vmatpush1.bf16.msra.mxu0 0
    %261 = vmatprep.subr.bf16.mxu0 0
    %262 = vmatpush1.bf16.msra.mxu0 0
    %263 = vmatprep.subr.bf16.mxu0 0
    %264 = vmatpush1.bf16.msra.mxu0 0
    %265 = vmatprep.subr.bf16.mxu0 0
    %266 = vmatpush1.bf16.msra.mxu0 0
    %267 = vmatprep.subr.bf16.mxu0 0
    %268 = vmatpush1.bf16.msra.mxu0 0
    %269 = vmatprep.subr.bf16.mxu0 0
    %270 = vmatpush1.bf16.msra.mxu0 0
    %271 = vmatprep.subr.bf16.mxu0 0
    %272 = vmatpush1.bf16.msra.mxu0 0
    %273 = vmatprep.subr.bf16.mxu0 0
    %274 = vmatpush1.bf16.msra.mxu0 0
    %275 = vmatprep.mubr.bf16.mxu0 0
    %276 = vmatmul.mubr.bf16.gmra.mrb[0].mxu0 %v133
    %v277 = vpop.f32.mrb[0].mxu0
    %v278 = vadd.f32 %v156, %v277
    %v279 = vpop.f32.mrb[0].mxu0
    %v280 = vadd.f32 %v160, %v279
    %v281 = vpop.f32.mrb[0].mxu0
    %v282 = vadd.f32 %v156, %v281
    %v283 = vpop.f32.mrb[0].mxu0
    %v284 = vadd.f32 %v160, %v283
    %285 = vmatprep.mubr.bf16.mxu0 0
    %286 = vmatmul.mubr.bf16.gmra.mrb[0].mxu0 %v134
    %v287 = vpop.f32.mrb[0].mxu0
    %v288 = vadd.f32 %v156, %v287
    %v289 = vpop.f32.mrb[0].mxu0
    %v290 = vadd.f32 %v160, %v289
    %v291 = vpop.f32.mrb[0].mxu0
    %v292 = vadd.f32 %v156, %v291
    %v293 = vpop.f32.mrb[0].mxu0
    %v294 = vadd.f32 %v160, %v293
    %295 = vdwg.mxu0
    %296 = vst [vmem:[#allocation8] sm:$0xff] %v278
    %297 = vst [vmem:[#allocation8 + $0x8] sm:$0xff] %v280
    %298 = vst [vmem:[#allocation8 + $0x10] sm:$0xff] %v282
    %299 = vst [vmem:[#allocation8 + $0x18] sm:$0xff] %v284
    %300 = vst [vmem:[#allocation8 + $0x20] sm:$0xff] %v288
    %301 = vst [vmem:[#allocation8 + $0x28] sm:$0xff] %v290
    %302 = vst [vmem:[#allocation8 + $0x30] sm:$0xff] %v292
    %303 = vst [vmem:[#allocation8 + $0x38] sm:$0xff] %v294
    // Predicated region
    $region34: #{tpu_custom_call.1} parent=1 // pred_check
      _
    $region35: #{tpu_custom_call.1} parent=1 // pred_check_branch
      %305 = sbr.rel (0) target = $region37
    $region36: #{tpu_custom_call.1} parent=1 // pred_region
      %s307 = ssub.s32 1024, 1024
      %308 = vsyncadd [#allocation5], %s307
      %s309 = sshll.u32 [#allocation8], 4
      %s310 = int_to_ptr.vmem [resolvable:$true] %s309
      %315 = dma.vmem_to_hbm [thread:$0]  %s310, 1024, %s5, [#allocation5], 256, 256, 16
    $region37: #{tpu_custom_call.1} parent=1 // pred_fallthru
      _
    // Predicated region
    $region38: #{tpu_custom_call.1} parent=1 // pred_check
      _
    $region39: #{tpu_custom_call.1} parent=1 // pred_check_branch
      %317 = sbr.rel (0) target = $region41
    $region40: #{tpu_custom_call.1} parent=1 // pred_region
      %318 = dma.done [#allocation5], 1024
    $region41: #{tpu_custom_call.1} parent=1 // pred_fallthru
      _
    %319 = vsyncpa [#allocation4], 1
    %320 = vsyncpa [#allocation7], 1
    %321 = vsyncpa [#allocation5], 1

</llo_original>
